<compile_context>
chip_gen: v7x
topology: tpu7x:2x2x1
jax: 0.10.0
libtpu: 0.0.40
codegen_flags: <defaults>
</compile_context>

<pallas_src>
import jax
import jax.numpy as jnp
from jax.experimental import pallas as pl
from jax.experimental.pallas import tpu as pltpu

# ---------------- model config (small, consistent with the module) ----------
VOCAB_SIZE = 50
EMBED_SIZE = 16                      # per-table embedding size -> 2E = 32
KERNEL_SIZES = (3, 4, 5)
NUM_CHANNELS = (8, 8, 16)
SUM_C = sum(NUM_CHANNELS)            # 32
BATCH = 2
SEQ_LEN = 12
NUM_CLASSES = 2

V_PAD = 64                           # per-position vocab padding (power of 2)
LV = SEQ_LEN * V_PAD                 # 768 one-hot columns
BIAS_COL = V_PAD - 1                 # col 63 (pos 0, token 63) can never be a
                                     # real token -> used as always-hot bias col
POOL_W = 40                          # 32 channels + 1 bias lane + pad (mult of 8)
BIAS_LANE = SUM_C                    # lane 32 of pooled acts is forced to 1.0
C_OUT_PAD = 128                      # lane-dense logits (first NUM_CLASSES valid)


# --------------------------- kernel -----------------------------------------
def make_textcnn_kernel(b_pad, seq_len, v_pad, bias_col):
    lv = seq_len * v_pad

    def kernel(tok_ref, w1_ref, w2_ref, out_ref):
        tok = tok_ref[...]                                        # (Bp, L) int32

        # hoisted per-position offset: one add instead of L-1 in-loop adds
        qoff = jax.lax.broadcasted_iota(jnp.int32, (b_pad, seq_len), 1) * v_pad
        shifted = tok + qoff                                      # (Bp, L)

        # one-hot over (position, token): column q*V_PAD + v hot iff tok[b,q]==v.
        # Pure VPU compares, no gather, no XLU.  Column BIAS_COL is always hot
        # (carries the conv bias + decoder-bias 1.0 lane via w1 row 63).
        col = jax.lax.broadcasted_iota(jnp.int32, (b_pad, lv), 1)
        oh = col == bias_col
        for q in range(seq_len):                                  # static, tiny
            oh = oh | (shifted[:, q:q + 1] == col)
        ohf = oh.astype(jnp.float32)                              # VPU path in f32

        # folded embedding-gather + conv + mean-pool (+ conv bias):
        # bf16 operands, f32 accumulation on the MXU.
        pooled = jnp.dot(ohf.astype(jnp.bfloat16), w1_ref[...],
                         preferred_element_type=jnp.float32)      # (Bp, POOL_W)
        enc = jnp.maximum(pooled, 0.0)                            # relu(pool);
                                                                  # lane 32 stays 1.0

        # TODO(synk): Dropout(0.5) is eval-mode identity here.

        # decoder (+ decoder bias via the 1.0 lane), lane-dense (Bp,128) output.
        out_ref[...] = jnp.dot(enc.astype(jnp.bfloat16), w2_ref[...],
                               preferred_element_type=jnp.float32)

    return kernel


# --------------------------- parameter folding (trace-time, done once) ------
def fold_params(emb, const_emb, conv_ws, conv_bs, wd, bd):
    """Fold embed+conv+pool into w1 (LV, POOL_W) bf16; decoder into w2 bf16."""
    emb_cat = jnp.concatenate([emb, const_emb], axis=1)          # (V, 2E)

    # per-position folded conv weight A: (L, 2E, SUM_C)
    a_blocks = []
    for k, c, w in zip(KERNEL_SIZES, NUM_CHANNELS, conv_ws):     # w: (k, 2E, c)
        lout = SEQ_LEN - k + 1
        rows = []
        for q in range(SEQ_LEN):
            t_lo, t_hi = max(0, q - lout + 1), min(k - 1, q)
            acc = sum(w[t] for t in range(t_lo, t_hi + 1))       # (2E, c)
            rows.append(acc / float(lout))
        a_blocks.append(jnp.stack(rows, axis=0))                 # (L, 2E, c)
    a = jnp.concatenate(a_blocks, axis=2)                        # (L, 2E, SUM_C)
    cbias = jnp.concatenate(conv_bs, axis=0)                     # (SUM_C,)

    # fold the embedding gather into the conv weight
    w_eff = jnp.einsum('ve,qec->qvc', emb_cat, a)                # (L, V, SUM_C)
    w_eff = jnp.pad(w_eff, ((0, 0),
                            (0, V_PAD - VOCAB_SIZE),
                            (0, POOL_W - SUM_C)))
    w_eff = w_eff.reshape(LV, POOL_W)                            # (768, 40)

    # bias row: the kernel makes column BIAS_COL always hot
    bias_row = (jnp.zeros((POOL_W,), jnp.float32)
                .at[:SUM_C].set(cbias)
                .at[BIAS_LANE].set(1.0))
    w1 = w_eff.at[BIAS_COL, :].set(bias_row).astype(jnp.bfloat16)

    # decoder weight with the bias folded into row BIAS_LANE
    w2 = (jnp.zeros((POOL_W, C_OUT_PAD), jnp.float32)
          .at[:SUM_C, :NUM_CLASSES].set(wd)
          .at[BIAS_LANE, :NUM_CLASSES].set(bd)).astype(jnp.bfloat16)
    return w1, w2


# --------------------------- wrapper -----------------------------------------
def textcnn_forward(inputs, w1, w2):
    """inputs: (B, L) int32 token ids; w1/w2: folded bf16 parameters."""
    batch, seq_len = inputs.shape
    assert seq_len * V_PAD == w1.shape[0], "seq_len mismatch with folded params"
    b_pad = max(8, -(-batch // 8) * 8)                  # full (8,128) store tiles
    tok = jnp.zeros((b_pad, seq_len), jnp.int32).at[:batch].set(
        inputs.astype(jnp.int32))

    kernel = make_textcnn_kernel(b_pad, seq_len, V_PAD, BIAS_COL)
    vmem = pl.BlockSpec(memory_space=pltpu.MemorySpace.VMEM)
    flops = 2 * b_pad * seq_len * V_PAD * POOL_W + 2 * b_pad * POOL_W * C_OUT_PAD
    bytes_accessed = (tok.size * 4 + w1.size * 2 + w2.size * 2
                      + b_pad * C_OUT_PAD * 4)

    out = pl.pallas_call(
        kernel,
        out_shape=jax.ShapeDtypeStruct((b_pad, C_OUT_PAD), jnp.float32),
        in_specs=[vmem, vmem, vmem],
        out_specs=vmem,
        cost_estimate=pl.CostEstimate(flops=flops, transcendentals=0,
                                      bytes_accessed=bytes_accessed),
    )(tok, w1, w2)
    return out[:batch, :NUM_CLASSES]


# --------------------------- pure-JAX reference -------------------------------
def ref_forward(inputs, emb, const_emb, conv_ws, conv_bs, wd, bd):
    """Same math as torch: embed -> conv1d -> avgpool(1) -> relu -> linear."""
    x = jnp.concatenate([emb[inputs], const_emb[inputs]], axis=2)  # (B, L, 2E)
    encs = []
    for k, c, w, b in zip(KERNEL_SIZES, NUM_CHANNELS, conv_ws, conv_bs):
        lout = SEQ_LEN - k + 1
        conv = jnp.zeros((x.shape[0], lout, c), jnp.float32)
        for t in range(k):
            conv = conv + jnp.einsum('ble,ec->blc', x[:, t:t + lout, :], w[t])
        pooled = conv.mean(axis=1) + b[None, :]         # AdaptiveAvgPool1d(1)
        encs.append(jnp.maximum(pooled, 0.0))           # relu after pool
    enc = jnp.concatenate(encs, axis=1)
    return enc @ wd + bd[None, :]                       # dropout = identity


if __name__ == "__main__":
    key = jax.random.PRNGKey(0)
    ks = jax.random.split(key, 16)

    # token ids (valid range [0, VOCAB_SIZE); ids >= VOCAB_SIZE are undefined,
    # as in torch nn.Embedding)
    inputs = jax.random.randint(ks[0], (BATCH, SEQ_LEN), 0, VOCAB_SIZE,
                                dtype=jnp.int32)

    # embedding tables (trainable + constant)
    emb = jax.random.normal(ks[1], (VOCAB_SIZE, EMBED_SIZE), jnp.float32) * 0.1
    const_emb = jax.random.normal(ks[2], (VOCAB_SIZE, EMBED_SIZE),
                                  jnp.float32) * 0.1

    # conv params: weight (k, 2E, c) (== torch Conv1d weight transposed), bias (c,)
    conv_ws, conv_bs = [], []
    for i, (k, c) in enumerate(zip(KERNEL_SIZES, NUM_CHANNELS)):
        conv_ws.append(jax.random.normal(
            ks[3 + 2 * i], (k, 2 * EMBED_SIZE, c), jnp.float32) * 0.1)
        conv_bs.append(jax.random.normal(
            ks[4 + 2 * i], (c,), jnp.float32) * 0.1)

    # decoder: Linear(sum(num_channels), 2) stored transposed as (SUM_C, 2)
    wd = jax.random.normal(ks[10], (SUM_C, NUM_CLASSES), jnp.float32) * 0.1
    bd = jax.random.normal(ks[11], (NUM_CLASSES,), jnp.float32) * 0.1

    # one-time parameter fold (in deployment this is precomputed once)
    w1, w2 = fold_params(emb, const_emb, conv_ws, conv_bs, wd, bd)

    out = textcnn_forward(inputs, w1, w2)
    out = jax.block_until_ready(out)

    ref = ref_forward(inputs, emb, const_emb, conv_ws, conv_bs, wd, bd)
    assert out.shape == (BATCH, NUM_CLASSES)
    # bf16 parameters -> relaxed tolerance per review
    assert jnp.allclose(out, ref, atol=1e-2, rtol=1e-2), (out, ref)

    print("KERNEL_OK")
</pallas_src>

<mosaic_0001>
module attributes {stable_mosaic.version = 11 : i64} {
  func.func @kernel(%arg0: memref<8x12xi32, #tpu.memory_space<vmem>>, %arg1: memref<768x40xbf16, #tpu.memory_space<vmem>>, %arg2: memref<40x128xbf16, #tpu.memory_space<vmem>>, %arg3: memref<8x128xf32, #tpu.memory_space<vmem>>) attributes {dimension_semantics = [], scalar_prefetch = 0 : i64, scratch_operands = 0 : i64, tpu.core_type = #tpu.core_type<tc>} {
    %c0 = arith.constant 0 : index
    %c0_0 = arith.constant 0 : index
    %0 = vector.load %arg0[%c0, %c0_0] : memref<8x12xi32, #tpu.memory_space<vmem>>, vector<8x12xi32>
    %1 = tpu.iota {dimensions = array<i32: 1>} : vector<8x12xi32>
    %c64_i32 = arith.constant 64 : i32
    %2 = vector.broadcast %c64_i32 : i32 to vector<8x12xi32>
    %3 = arith.muli %1, %2 : vector<8x12xi32>
    %4 = arith.addi %0, %3 : vector<8x12xi32>
    %5 = tpu.iota {dimensions = array<i32: 1>} : vector<8x768xi32>
    %c63_i32 = arith.constant 63 : i32
    %6 = vector.broadcast %c63_i32 : i32 to vector<8x768xi32>
    %7 = arith.cmpi eq, %5, %6 : vector<8x768xi32>
    %8 = vector.extract_strided_slice %4 {offsets = [0, 0], sizes = [8, 1], strides = [1, 1]} : vector<8x12xi32> to vector<8x1xi32>
    %9 = vector.broadcast %8 : vector<8x1xi32> to vector<8x768xi32>
    %10 = arith.cmpi eq, %9, %5 : vector<8x768xi32>
    %11 = arith.ori %7, %10 : vector<8x768xi1>
    %12 = vector.extract_strided_slice %4 {offsets = [0, 1], sizes = [8, 1], strides = [1, 1]} : vector<8x12xi32> to vector<8x1xi32>
    %13 = vector.broadcast %12 : vector<8x1xi32> to vector<8x768xi32>
    %14 = arith.cmpi eq, %13, %5 : vector<8x768xi32>
    %15 = arith.ori %11, %14 : vector<8x768xi1>
    %16 = vector.extract_strided_slice %4 {offsets = [0, 2], sizes = [8, 1], strides = [1, 1]} : vector<8x12xi32> to vector<8x1xi32>
    %17 = vector.broadcast %16 : vector<8x1xi32> to vector<8x768xi32>
    %18 = arith.cmpi eq, %17, %5 : vector<8x768xi32>
    %19 = arith.ori %15, %18 : vector<8x768xi1>
    %20 = vector.extract_strided_slice %4 {offsets = [0, 3], sizes = [8, 1], strides = [1, 1]} : vector<8x12xi32> to vector<8x1xi32>
    %21 = vector.broadcast %20 : vector<8x1xi32> to vector<8x768xi32>
    %22 = arith.cmpi eq, %21, %5 : vector<8x768xi32>
    %23 = arith.ori %19, %22 : vector<8x768xi1>
    %24 = vector.extract_strided_slice %4 {offsets = [0, 4], sizes = [8, 1], strides = [1, 1]} : vector<8x12xi32> to vector<8x1xi32>
    %25 = vector.broadcast %24 : vector<8x1xi32> to vector<8x768xi32>
    %26 = arith.cmpi eq, %25, %5 : vector<8x768xi32>
    %27 = arith.ori %23, %26 : vector<8x768xi1>
    %28 = vector.extract_strided_slice %4 {offsets = [0, 5], sizes = [8, 1], strides = [1, 1]} : vector<8x12xi32> to vector<8x1xi32>
    %29 = vector.broadcast %28 : vector<8x1xi32> to vector<8x768xi32>
    %30 = arith.cmpi eq, %29, %5 : vector<8x768xi32>
    %31 = arith.ori %27, %30 : vector<8x768xi1>
    %32 = vector.extract_strided_slice %4 {offsets = [0, 6], sizes = [8, 1], strides = [1, 1]} : vector<8x12xi32> to vector<8x1xi32>
    %33 = vector.broadcast %32 : vector<8x1xi32> to vector<8x768xi32>
    %34 = arith.cmpi eq, %33, %5 : vector<8x768xi32>
    %35 = arith.ori %31, %34 : vector<8x768xi1>
    %36 = vector.extract_strided_slice %4 {offsets = [0, 7], sizes = [8, 1], strides = [1, 1]} : vector<8x12xi32> to vector<8x1xi32>
    %37 = vector.broadcast %36 : vector<8x1xi32> to vector<8x768xi32>
    %38 = arith.cmpi eq, %37, %5 : vector<8x768xi32>
    %39 = arith.ori %35, %38 : vector<8x768xi1>
    %40 = vector.extract_strided_slice %4 {offsets = [0, 8], sizes = [8, 1], strides = [1, 1]} : vector<8x12xi32> to vector<8x1xi32>
    %41 = vector.broadcast %40 : vector<8x1xi32> to vector<8x768xi32>
    %42 = arith.cmpi eq, %41, %5 : vector<8x768xi32>
    %43 = arith.ori %39, %42 : vector<8x768xi1>
    %44 = vector.extract_strided_slice %4 {offsets = [0, 9], sizes = [8, 1], strides = [1, 1]} : vector<8x12xi32> to vector<8x1xi32>
    %45 = vector.broadcast %44 : vector<8x1xi32> to vector<8x768xi32>
    %46 = arith.cmpi eq, %45, %5 : vector<8x768xi32>
    %47 = arith.ori %43, %46 : vector<8x768xi1>
    %48 = vector.extract_strided_slice %4 {offsets = [0, 10], sizes = [8, 1], strides = [1, 1]} : vector<8x12xi32> to vector<8x1xi32>
    %49 = vector.broadcast %48 : vector<8x1xi32> to vector<8x768xi32>
    %50 = arith.cmpi eq, %49, %5 : vector<8x768xi32>
    %51 = arith.ori %47, %50 : vector<8x768xi1>
    %52 = vector.extract_strided_slice %4 {offsets = [0, 11], sizes = [8, 1], strides = [1, 1]} : vector<8x12xi32> to vector<8x1xi32>
    %53 = vector.broadcast %52 : vector<8x1xi32> to vector<8x768xi32>
    %54 = arith.cmpi eq, %53, %5 : vector<8x768xi32>
    %55 = arith.ori %51, %54 : vector<8x768xi1>
    %56 = arith.extui %55 : vector<8x768xi1> to vector<8x768xi32>
    %57 = arith.sitofp %56 : vector<8x768xi32> to vector<8x768xf32>
    %58 = arith.truncf %57 : vector<8x768xf32> to vector<8x768xbf16>
    %c0_1 = arith.constant 0 : index
    %c0_2 = arith.constant 0 : index
    %59 = vector.load %arg1[%c0_1, %c0_2] : memref<768x40xbf16, #tpu.memory_space<vmem>>, vector<768x40xbf16>
    %cst = arith.constant dense<0.000000e+00> : vector<8x40xf32>
    %60 = tpu.matmul %58, %59, %cst {dimension_numbers = #tpu.dot_dimension_numbers<[1], [0], [0], [1], [0, 0, 1, 1], [], []>} : vector<8x768xbf16>, vector<768x40xbf16>, vector<8x40xf32> -> vector<8x40xf32>
    %cst_3 = arith.constant 0.000000e+00 : f32
    %61 = vector.broadcast %cst_3 : f32 to vector<8x40xf32>
    %62 = arith.maximumf %60, %61 : vector<8x40xf32>
    %63 = arith.truncf %62 : vector<8x40xf32> to vector<8x40xbf16>
    %c0_4 = arith.constant 0 : index
    %c0_5 = arith.constant 0 : index
    %64 = vector.load %arg2[%c0_4, %c0_5] : memref<40x128xbf16, #tpu.memory_space<vmem>>, vector<40x128xbf16>
    %cst_6 = arith.constant dense<0.000000e+00> : vector<8x128xf32>
    %65 = tpu.matmul %63, %64, %cst_6 {dimension_numbers = #tpu.dot_dimension_numbers<[1], [0], [0], [1], [0, 0, 1, 1], [], []>} : vector<8x40xbf16>, vector<40x128xbf16>, vector<8x128xf32> -> vector<8x128xf32>
    %c0_7 = arith.constant 0 : index
    %c0_8 = arith.constant 0 : index
    %66 = vector.load %arg3[%c0_7, %c0_8] : memref<8x128xf32, #tpu.memory_space<vmem>>, vector<8x128xf32>
    tpu.vector_store %arg3[%c0_7, %c0_8], %65 {strides = array<i32>} : memref<8x128xf32, #tpu.memory_space<vmem>>, vector<8x128xf32>,
    return
  }
}

</mosaic_0001>

<llo_original>
// kernel: tpu_custom_call.1
$region0: #{tpu_custom_call.1}
  #allocation0 [shape = 'u32[]', space=smem, size = 0x4, offset = 0x4, fixed_abs, tag = 'smem constant byte address 0x4 - core index']
  #allocation1 [shape = 'u32[144,128]{1,0:T(1,128)}', space=vmem, size = 0x12000, scoped, tag = 'internal scratch']
  %s0 = inlined_call_operand.vmem [shape: s32[8,12], index: 0, kind: input, shape index: {}]
  %s1 = inlined_call_operand.vmem [shape: bf16[768,40], index: 1, kind: input, shape index: {}]
  %s2 = inlined_call_operand.vmem [shape: bf16[40,128], index: 2, kind: input, shape index: {}]
  %s3 = inlined_call_operand.hbm [shape: f32[8,128], index: 3, kind: output, shape index: {}]
  %s4 = sld [smem:[#allocation0]]
  $region22: #{tpu_custom_call.1} parent=0
    _
  %s6 = ssub.s32 1, %s4
  %s7 = scalar_select 0, %s6, %s4
  $region1: #{tpu_custom_call.1} parent=0
    #allocation2 [shape = 'u8[4096]{0}', space=vmem, size = 0x1000, scoped, tag = 'output window, operand 0, single buffered']
    #allocation3 [shape = 's32[1]{0}', space=sflag, size = 0x4, scoped, tag = 'scoped memory for tpu_custom_call.1']
    %8 = vsyncpa [#allocation3], 0
    // Predicated region
    $region2: #{tpu_custom_call.1} parent=1 // pred_check
      _
    $region3: #{tpu_custom_call.1} parent=1 // pred_check_branch
      %10 = sbr.rel (0) target = $region5
    $region4: #{tpu_custom_call.1} parent=1 // pred_region
      _
    $region5: #{tpu_custom_call.1} parent=1 // pred_fallthru
      _
    // Predicated region
    $region6: #{tpu_custom_call.1} parent=1 // pred_check
      _
    $region7: #{tpu_custom_call.1} parent=1 // pred_check_branch
      %12 = sbr.rel (0) target = $region9
    $region8: #{tpu_custom_call.1} parent=1 // pred_region
      _
    $region9: #{tpu_custom_call.1} parent=1 // pred_fallthru
      _
    // Predicated region
    $region10: #{tpu_custom_call.1} parent=1 // pred_check
      _
    $region11: #{tpu_custom_call.1} parent=1 // pred_check_branch
      %14 = sbr.rel (0) target = $region13
    $region12: #{tpu_custom_call.1} parent=1 // pred_region
      _
    $region13: #{tpu_custom_call.1} parent=1 // pred_fallthru
      _
    %v16 = vld [vmem:[%s0] sm:$0xff]
    %v17 = vlaneseq
    %v18 = vand.u32 %v17, 127
    %v19 = vmul.u32 %v18, 64
    %v20 = vadd.s32 %v16, %v19
    %v21 = vadd.s32 %v18, 128
    %v22 = vadd.s32 %v18, 256
    %v23 = vadd.s32 %v18, 384
    %v24 = vadd.s32 %v18, 512
    %v25 = vadd.s32 %v18, 640
    %vm26 = vcmp.eq.s32.totalorder %v18, 63
    %vm27 = vcmp.eq.s32.totalorder %v21, 63
    %vm28 = vcmp.eq.s32.totalorder %v22, 63
    %vm29 = vcmp.eq.s32.totalorder %v23, 63
    %vm30 = vcmp.eq.s32.totalorder %v24, 63
    %vm31 = vcmp.eq.s32.totalorder %v25, 63
    %32 = vset.pattern.permute.xlu0 0
    %33 = vperm.xlu0 %32, %v20
    %v34 = vpop.permute.xlu0 %33
    %vm35 = vcmp.eq.s32.totalorder %v34, %v18
    %vm36 = vcmp.eq.s32.totalorder %v34, %v21
    %vm37 = vcmp.eq.s32.totalorder %v34, %v22
    %vm38 = vcmp.eq.s32.totalorder %v34, %v23
    %vm39 = vcmp.eq.s32.totalorder %v34, %v24
    %vm40 = vcmp.eq.s32.totalorder %v34, %v25
    %vm41 = vmor %vm26, %vm35
    %vm42 = vmor %vm27, %vm36
    %vm43 = vmor %vm28, %vm37
    %vm44 = vmor %vm29, %vm38
    %vm45 = vmor %vm30, %vm39
    %vm46 = vmor %vm31, %vm40
    %47 = vset.pattern.permute.xlu0 1
    %48 = vperm.xlu0 %47, %v20
    %v49 = vpop.permute.xlu0 %48
    %vm50 = vcmp.eq.s32.totalorder %v49, %v18
    %vm51 = vcmp.eq.s32.totalorder %v49, %v21
    %vm52 = vcmp.eq.s32.totalorder %v49, %v22
    %vm53 = vcmp.eq.s32.totalorder %v49, %v23
    %vm54 = vcmp.eq.s32.totalorder %v49, %v24
    %vm55 = vcmp.eq.s32.totalorder %v49, %v25
    %vm56 = vmor %vm41, %vm50
    %vm57 = vmor %vm42, %vm51
    %vm58 = vmor %vm43, %vm52
    %vm59 = vmor %vm44, %vm53
    %vm60 = vmor %vm45, %vm54
    %vm61 = vmor %vm46, %vm55
    %62 = vset.pattern.permute.xlu0 2
    %63 = vperm.xlu0 %62, %v20
    %v64 = vpop.permute.xlu0 %63
    %vm65 = vcmp.eq.s32.totalorder %v64, %v18
    %vm66 = vcmp.eq.s32.totalorder %v64, %v21
    %vm67 = vcmp.eq.s32.totalorder %v64, %v22
    %vm68 = vcmp.eq.s32.totalorder %v64, %v23
    %vm69 = vcmp.eq.s32.totalorder %v64, %v24
    %vm70 = vcmp.eq.s32.totalorder %v64, %v25
    %vm71 = vmor %vm56, %vm65
    %vm72 = vmor %vm57, %vm66
    %vm73 = vmor %vm58, %vm67
    %vm74 = vmor %vm59, %vm68
    %vm75 = vmor %vm60, %vm69
    %vm76 = vmor %vm61, %vm70
    %77 = vset.pattern.permute.xlu0 3
    %78 = vperm.xlu0 %77, %v20
    %v79 = vpop.permute.xlu0 %78
    %vm80 = vcmp.eq.s32.totalorder %v79, %v18
    %vm81 = vcmp.eq.s32.totalorder %v79, %v21
    %vm82 = vcmp.eq.s32.totalorder %v79, %v22
    %vm83 = vcmp.eq.s32.totalorder %v79, %v23
    %vm84 = vcmp.eq.s32.totalorder %v79, %v24
    %vm85 = vcmp.eq.s32.totalorder %v79, %v25
    %vm86 = vmor %vm71, %vm80
    %vm87 = vmor %vm72, %vm81
    %vm88 = vmor %vm73, %vm82
    %vm89 = vmor %vm74, %vm83
    %vm90 = vmor %vm75, %vm84
    %vm91 = vmor %vm76, %vm85
    %92 = vset.pattern.permute.xlu0 4
    %93 = vperm.xlu0 %92, %v20
    %v94 = vpop.permute.xlu0 %93
    %vm95 = vcmp.eq.s32.totalorder %v94, %v18
    %vm96 = vcmp.eq.s32.totalorder %v94, %v21
    %vm97 = vcmp.eq.s32.totalorder %v94, %v22
    %vm98 = vcmp.eq.s32.totalorder %v94, %v23
    %vm99 = vcmp.eq.s32.totalorder %v94, %v24
    %vm100 = vcmp.eq.s32.totalorder %v94, %v25
    %vm101 = vmor %vm86, %vm95
    %vm102 = vmor %vm87, %vm96
    %vm103 = vmor %vm88, %vm97
    %vm104 = vmor %vm89, %vm98
    %vm105 = vmor %vm90, %vm99
    %vm106 = vmor %vm91, %vm100
    %107 = vset.pattern.permute.xlu0 5
    %108 = vperm.xlu0 %107, %v20
    %v109 = vpop.permute.xlu0 %108
    %vm110 = vcmp.eq.s32.totalorder %v109, %v18
    %vm111 = vcmp.eq.s32.totalorder %v109, %v21
    %vm112 = vcmp.eq.s32.totalorder %v109, %v22
    %vm113 = vcmp.eq.s32.totalorder %v109, %v23
    %vm114 = vcmp.eq.s32.totalorder %v109, %v24
    %vm115 = vcmp.eq.s32.totalorder %v109, %v25
    %vm116 = vmor %vm101, %vm110
    %vm117 = vmor %vm102, %vm111
    %vm118 = vmor %vm103, %vm112
    %vm119 = vmor %vm104, %vm113
    %vm120 = vmor %vm105, %vm114
    %vm121 = vmor %vm106, %vm115
    %122 = vset.pattern.permute.xlu0 6
    %123 = vperm.xlu0 %122, %v20
    %v124 = vpop.permute.xlu0 %123
    %vm125 = vcmp.eq.s32.totalorder %v124, %v18
    %vm126 = vcmp.eq.s32.totalorder %v124, %v21
    %vm127 = vcmp.eq.s32.totalorder %v124, %v22
    %vm128 = vcmp.eq.s32.totalorder %v124, %v23
    %vm129 = vcmp.eq.s32.totalorder %v124, %v24
    %vm130 = vcmp.eq.s32.totalorder %v124, %v25
    %vm131 = vmor %vm116, %vm125
    %vm132 = vmor %vm117, %vm126
    %vm133 = vmor %vm118, %vm127
    %vm134 = vmor %vm119, %vm128
    %vm135 = vmor %vm120, %vm129
    %vm136 = vmor %vm121, %vm130
    %137 = vset.pattern.permute.xlu0 7
    %138 = vperm.xlu0 %137, %v20
    %v139 = vpop.permute.xlu0 %138
    %vm140 = vcmp.eq.s32.totalorder %v139, %v18
    %vm141 = vcmp.eq.s32.totalorder %v139, %v21
    %vm142 = vcmp.eq.s32.totalorder %v139, %v22
    %vm143 = vcmp.eq.s32.totalorder %v139, %v23
    %vm144 = vcmp.eq.s32.totalorder %v139, %v24
    %vm145 = vcmp.eq.s32.totalorder %v139, %v25
    %vm146 = vmor %vm131, %vm140
    %vm147 = vmor %vm132, %vm141
    %vm148 = vmor %vm133, %vm142
    %vm149 = vmor %vm134, %vm143
    %vm150 = vmor %vm135, %vm144
    %vm151 = vmor %vm136, %vm145
    %152 = vset.pattern.permute.xlu0 8
    %153 = vperm.xlu0 %152, %v20
    %v154 = vpop.permute.xlu0 %153
    %vm155 = vcmp.eq.s32.totalorder %v154, %v18
    %vm156 = vcmp.eq.s32.totalorder %v154, %v21
    %vm157 = vcmp.eq.s32.totalorder %v154, %v22
    %vm158 = vcmp.eq.s32.totalorder %v154, %v23
    %vm159 = vcmp.eq.s32.totalorder %v154, %v24
    %vm160 = vcmp.eq.s32.totalorder %v154, %v25
    %vm161 = vmor %vm146, %vm155
    %vm162 = vmor %vm147, %vm156
    %vm163 = vmor %vm148, %vm157
    %vm164 = vmor %vm149, %vm158
    %vm165 = vmor %vm150, %vm159
    %vm166 = vmor %vm151, %vm160
    %167 = vset.pattern.permute.xlu0 9
    %168 = vperm.xlu0 %167, %v20
    %v169 = vpop.permute.xlu0 %168
    %vm170 = vcmp.eq.s32.totalorder %v169, %v18
    %vm171 = vcmp.eq.s32.totalorder %v169, %v21
    %vm172 = vcmp.eq.s32.totalorder %v169, %v22
    %vm173 = vcmp.eq.s32.totalorder %v169, %v23
    %vm174 = vcmp.eq.s32.totalorder %v169, %v24
    %vm175 = vcmp.eq.s32.totalorder %v169, %v25
    %vm176 = vmor %vm161, %vm170
    %vm177 = vmor %vm162, %vm171
    %vm178 = vmor %vm163, %vm172
    %vm179 = vmor %vm164, %vm173
    %vm180 = vmor %vm165, %vm174
    %vm181 = vmor %vm166, %vm175
    %182 = vset.pattern.permute.xlu0 10
    %183 = vperm.xlu0 %182, %v20
    %v184 = vpop.permute.xlu0 %183
    %vm185 = vcmp.eq.s32.totalorder %v184, %v18
    %vm186 = vcmp.eq.s32.totalorder %v184, %v21
    %vm187 = vcmp.eq.s32.totalorder %v184, %v22
    %vm188 = vcmp.eq.s32.totalorder %v184, %v23
    %vm189 = vcmp.eq.s32.totalorder %v184, %v24
    %vm190 = vcmp.eq.s32.totalorder %v184, %v25
    %vm191 = vmor %vm176, %vm185
    %vm192 = vmor %vm177, %vm186
    %vm193 = vmor %vm178, %vm187
    %vm194 = vmor %vm179, %vm188
    %vm195 = vmor %vm180, %vm189
    %vm196 = vmor %vm181, %vm190
    %197 = vset.pattern.permute.xlu0 11
    %198 = vperm.xlu0 %197, %v20
    %v199 = vpop.permute.xlu0 %198
    %vm200 = vcmp.eq.s32.totalorder %v199, %v18
    %vm201 = vcmp.eq.s32.totalorder %v199, %v21
    %vm202 = vcmp.eq.s32.totalorder %v199, %v22
    %vm203 = vcmp.eq.s32.totalorder %v199, %v23
    %vm204 = vcmp.eq.s32.totalorder %v199, %v24
    %vm205 = vcmp.eq.s32.totalorder %v199, %v25
    %vm206 = vmor %vm191, %vm200
    %vm207 = vmor %vm192, %vm201
    %vm208 = vmor %vm193, %vm202
    %vm209 = vmor %vm194, %vm203
    %vm210 = vmor %vm195, %vm204
    %vm211 = vmor %vm196, %vm205
    %v212 = vsel %vm206, 1, 0
    %v213 = vsel %vm207, 1, 0
    %v214 = vsel %vm208, 1, 0
    %v215 = vsel %vm209, 1, 0
    %v216 = vsel %vm210, 1, 0
    %v217 = vsel %vm211, 1, 0
    %v218 = vcvt.s32.f32 %v212
    %v219 = vcvt.s32.f32 %v213
    %v220 = vcvt.s32.f32 %v214
    %v221 = vcvt.s32.f32 %v215
    %v222 = vcvt.s32.f32 %v216
    %v223 = vcvt.s32.f32 %v217
    %v224 = vpack.c.bf16 %v218, %v218
    %v225 = vpack.c.bf16 %v219, %v219
    %v226 = vpack.c.bf16 %v220, %v220
    %v227 = vpack.c.bf16 %v221, %v221
    %v228 = vpack.c.bf16 %v222, %v222
    %v229 = vpack.c.bf16 %v223, %v223
    %v230 = vld [vmem:[%s1] sm:$0xf]
    %v231 = vld [vmem:[%s1 + $0x4] sm:$0xf]
    %v232 = vld [vmem:[%s1 + $0x8] sm:$0xf]
    %v233 = vld [vmem:[%s1 + $0xc] sm:$0xf]
    %v234 = vld [vmem:[%s1 + $0x10] sm:$0xf]
    %v235 = vld [vmem:[%s1 + $0x14] sm:$0xf]
    %v236 = vld [vmem:[%s1 + $0x18] sm:$0xf]
    %v237 = vld [vmem:[%s1 + $0x1c] sm:$0xf]
    %v238 = vld [vmem:[%s1 + $0x20] sm:$0xf]
    %v239 = vld [vmem:[%s1 + $0x24] sm:$0xf]
    %v240 = vld [vmem:[%s1 + $0x28] sm:$0xf]
    %v241 = vld [vmem:[%s1 + $0x2c] sm:$0xf]
    %v242 = vld [vmem:[%s1 + $0x30] sm:$0xf]
    %v243 = vld [vmem:[%s1 + $0x34] sm:$0xf]
    %v244 = vld [vmem:[%s1 + $0x38] sm:$0xf]
    %v245 = vld [vmem:[%s1 + $0x3c] sm:$0xf]
    %v246 = vld [vmem:[%s1 + $0x40] sm:$0xf]
    %v247 = vld [vmem:[%s1 + $0x44] sm:$0xf]
    %v248 = vld [vmem:[%s1 + $0x48] sm:$0xf]
    %v249 = vld [vmem:[%s1 + $0x4c] sm:$0xf]
    %v250 = vld [vmem:[%s1 + $0x50] sm:$0xf]
    %v251 = vld [vmem:[%s1 + $0x54] sm:$0xf]
    %v252 = vld [vmem:[%s1 + $0x58] sm:$0xf]
    %v253 = vld [vmem:[%s1 + $0x5c] sm:$0xf]
    %v254 = vld [vmem:[%s1 + $0x60] sm:$0xf]
    %v255 = vld [vmem:[%s1 + $0x64] sm:$0xf]
    %v256 = vld [vmem:[%s1 + $0x68] sm:$0xf]
    %v257 = vld [vmem:[%s1 + $0x6c] sm:$0xf]
    %v258 = vld [vmem:[%s1 + $0x70] sm:$0xf]
    %v259 = vld [vmem:[%s1 + $0x74] sm:$0xf]
    %v260 = vld [vmem:[%s1 + $0x78] sm:$0xf]
    %v261 = vld [vmem:[%s1 + $0x7c] sm:$0xf]
    %v262 = vld [vmem:[%s1 + $0x80] sm:$0xf]
    %v263 = vld [vmem:[%s1 + $0x84] sm:$0xf]
    %v264 = vld [vmem:[%s1 + $0x88] sm:$0xf]
    %v265 = vld [vmem:[%s1 + $0x8c] sm:$0xf]
    %v266 = vld [vmem:[%s1 + $0x90] sm:$0xf]
    %v267 = vld [vmem:[%s1 + $0x94] sm:$0xf]
    %v268 = vld [vmem:[%s1 + $0x98] sm:$0xf]
    %v269 = vld [vmem:[%s1 + $0x9c] sm:$0xf]
    %v270 = vld [vmem:[%s1 + $0xa0] sm:$0xf]
    %v271 = vld [vmem:[%s1 + $0xa4] sm:$0xf]
    %v272 = vld [vmem:[%s1 + $0xa8] sm:$0xf]
    %v273 = vld [vmem:[%s1 + $0xac] sm:$0xf]
    %v274 = vld [vmem:[%s1 + $0xb0] sm:$0xf]
    %v275 = vld [vmem:[%s1 + $0xb4] sm:$0xf]
    %v276 = vld [vmem:[%s1 + $0xb8] sm:$0xf]
    %v277 = vld [vmem:[%s1 + $0xbc] sm:$0xf]
    %v278 = vld [vmem:[%s1 + $0xc0] sm:$0xf]
    %v279 = vld [vmem:[%s1 + $0xc4] sm:$0xf]
    %v280 = vld [vmem:[%s1 + $0xc8] sm:$0xf]
    %v281 = vld [vmem:[%s1 + $0xcc] sm:$0xf]
    %v282 = vld [vmem:[%s1 + $0xd0] sm:$0xf]
    %v283 = vld [vmem:[%s1 + $0xd4] sm:$0xf]
    %v284 = vld [vmem:[%s1 + $0xd8] sm:$0xf]
    %v285 = vld [vmem:[%s1 + $0xdc] sm:$0xf]
    %v286 = vld [vmem:[%s1 + $0xe0] sm:$0xf]
    %v287 = vld [vmem:[%s1 + $0xe4] sm:$0xf]
    %v288 = vld [vmem:[%s1 + $0xe8] sm:$0xf]
    %v289 = vld [vmem:[%s1 + $0xec] sm:$0xf]
    %v290 = vld [vmem:[%s1 + $0xf0] sm:$0xf]
    %v291 = vld [vmem:[%s1 + $0xf4] sm:$0xf]
    %v292 = vld [vmem:[%s1 + $0xf8] sm:$0xf]
    %v293 = vld [vmem:[%s1 + $0xfc] sm:$0xf]
    %v294 = vld [vmem:[%s1 + $0x100] sm:$0xf]
    %v295 = vld [vmem:[%s1 + $0x104] sm:$0xf]
    %v296 = vld [vmem:[%s1 + $0x108] sm:$0xf]
    %v297 = vld [vmem:[%s1 + $0x10c] sm:$0xf]
    %v298 = vld [vmem:[%s1 + $0x110] sm:$0xf]
    %v299 = vld [vmem:[%s1 + $0x114] sm:$0xf]
    %v300 = vld [vmem:[%s1 + $0x118] sm:$0xf]
    %v301 = vld [vmem:[%s1 + $0x11c] sm:$0xf]
    %v302 = vld [vmem:[%s1 + $0x120] sm:$0xf]
    %v303 = vld [vmem:[%s1 + $0x124] sm:$0xf]
    %v304 = vld [vmem:[%s1 + $0x128] sm:$0xf]
    %v305 = vld [vmem:[%s1 + $0x12c] sm:$0xf]
    %v306 = vld [vmem:[%s1 + $0x130] sm:$0xf]
    %v307 = vld [vmem:[%s1 + $0x134] sm:$0xf]
    %v308 = vld [vmem:[%s1 + $0x138] sm:$0xf]
    %v309 = vld [vmem:[%s1 + $0x13c] sm:$0xf]
    %v310 = vld [vmem:[%s1 + $0x140] sm:$0xf]
    %v311 = vld [vmem:[%s1 + $0x144] sm:$0xf]
    %v312 = vld [vmem:[%s1 + $0x148] sm:$0xf]
    %v313 = vld [vmem:[%s1 + $0x14c] sm:$0xf]
    %v314 = vld [vmem:[%s1 + $0x150] sm:$0xf]
    %v315 = vld [vmem:[%s1 + $0x154] sm:$0xf]
    %v316 = vld [vmem:[%s1 + $0x158] sm:$0xf]
    %v317 = vld [vmem:[%s1 + $0x15c] sm:$0xf]
    %v318 = vld [vmem:[%s1 + $0x160] sm:$0xf]
    %v319 = vld [vmem:[%s1 + $0x164] sm:$0xf]
    %v320 = vld [vmem:[%s1 + $0x168] sm:$0xf]
    %v321 = vld [vmem:[%s1 + $0x16c] sm:$0xf]
    %v322 = vld [vmem:[%s1 + $0x170] sm:$0xf]
    %v323 = vld [vmem:[%s1 + $0x174] sm:$0xf]
    %v324 = vld [vmem:[%s1 + $0x178] sm:$0xf]
    %v325 = vld [vmem:[%s1 + $0x17c] sm:$0xf]
    %v422 = vunpack.c.l.b16 %v230
    %v423 = vunpack.c.l.b16 %v231
    %v424 = vunpack.c.l.b16 %v232
    %v425 = vunpack.c.l.b16 %v233
    %v426 = vunpack.c.l.b16 %v234
    %v427 = vunpack.c.l.b16 %v235
    %v428 = vunpack.c.l.b16 %v236
    %v429 = vunpack.c.l.b16 %v237
    %v430 = vunpack.c.l.b16 %v238
    %v431 = vunpack.c.l.b16 %v239
    %v432 = vunpack.c.l.b16 %v240
    %v433 = vunpack.c.l.b16 %v241
    %v434 = vunpack.c.l.b16 %v242
    %v435 = vunpack.c.l.b16 %v243
    %v436 = vunpack.c.l.b16 %v244
    %v437 = vunpack.c.l.b16 %v245
    %v438 = vunpack.c.l.b16 %v246
    %v439 = vunpack.c.l.b16 %v247
    %v440 = vunpack.c.l.b16 %v248
    %v441 = vunpack.c.l.b16 %v249
    %v442 = vunpack.c.l.b16 %v250
    %v443 = vunpack.c.l.b16 %v251
    %v444 = vunpack.c.l.b16 %v252
    %v445 = vunpack.c.l.b16 %v253
    %v446 = vunpack.c.l.b16 %v254
    %v447 = vunpack.c.l.b16 %v255
    %v448 = vunpack.c.l.b16 %v256
    %v449 = vunpack.c.l.b16 %v257
    %v450 = vunpack.c.l.b16 %v258
    %v451 = vunpack.c.l.b16 %v259
    %v452 = vunpack.c.l.b16 %v260
    %v453 = vunpack.c.l.b16 %v261
    %v454 = vunpack.c.l.b16 %v262
    %v455 = vunpack.c.l.b16 %v263
    %v456 = vunpack.c.l.b16 %v264
    %v457 = vunpack.c.l.b16 %v265
    %v458 = vunpack.c.l.b16 %v266
    %v459 = vunpack.c.l.b16 %v267
    %v460 = vunpack.c.l.b16 %v268
    %v461 = vunpack.c.l.b16 %v269
    %v462 = vunpack.c.l.b16 %v270
    %v463 = vunpack.c.l.b16 %v271
    %v464 = vunpack.c.l.b16 %v272
    %v465 = vunpack.c.l.b16 %v273
    %v466 = vunpack.c.l.b16 %v274
    %v467 = vunpack.c.l.b16 %v275
    %v468 = vunpack.c.l.b16 %v276
    %v469 = vunpack.c.l.b16 %v277
    %v470 = vunpack.c.l.b16 %v278
    %v471 = vunpack.c.l.b16 %v279
    %v472 = vunpack.c.l.b16 %v280
    %v473 = vunpack.c.l.b16 %v281
    %v474 = vunpack.c.l.b16 %v282
    %v475 = vunpack.c.l.b16 %v283
    %v476 = vunpack.c.l.b16 %v284
    %v477 = vunpack.c.l.b16 %v285
    %v478 = vunpack.c.l.b16 %v286
    %v479 = vunpack.c.l.b16 %v287
    %v480 = vunpack.c.l.b16 %v288
    %v481 = vunpack.c.l.b16 %v289
    %v482 = vunpack.c.l.b16 %v290
    %v483 = vunpack.c.l.b16 %v291
    %v484 = vunpack.c.l.b16 %v292
    %v485 = vunpack.c.l.b16 %v293
    %v486 = vunpack.c.l.b16 %v294
    %v487 = vunpack.c.l.b16 %v295
    %v488 = vunpack.c.l.b16 %v296
    %v489 = vunpack.c.l.b16 %v297
    %v490 = vunpack.c.l.b16 %v298
    %v491 = vunpack.c.l.b16 %v299
    %v492 = vunpack.c.l.b16 %v300
    %v493 = vunpack.c.l.b16 %v301
    %v494 = vunpack.c.l.b16 %v302
    %v495 = vunpack.c.l.b16 %v303
    %v496 = vunpack.c.l.b16 %v304
    %v497 = vunpack.c.l.b16 %v305
    %v498 = vunpack.c.l.b16 %v306
    %v499 = vunpack.c.l.b16 %v307
    %v500 = vunpack.c.l.b16 %v308
    %v501 = vunpack.c.l.b16 %v309
    %v502 = vunpack.c.l.b16 %v310
    %v503 = vunpack.c.l.b16 %v311
    %v504 = vunpack.c.l.b16 %v312
    %v505 = vunpack.c.l.b16 %v313
    %v506 = vunpack.c.l.b16 %v314
    %v507 = vunpack.c.l.b16 %v315
    %v508 = vunpack.c.l.b16 %v316
    %v509 = vunpack.c.l.b16 %v317
    %v510 = vunpack.c.l.b16 %v318
    %v511 = vunpack.c.l.b16 %v319
    %v512 = vunpack.c.l.b16 %v320
    %v513 = vunpack.c.l.b16 %v321
    %v514 = vunpack.c.l.b16 %v322
    %v515 = vunpack.c.l.b16 %v323
    %v516 = vunpack.c.l.b16 %v324
    %v517 = vunpack.c.l.b16 %v325
    %v518 = vpack.c.b16 %v423, %v422
    %v519 = vpack.c.b16 %v425, %v424
    %v520 = vpack.c.b16 %v427, %v426
    %v521 = vpack.c.b16 %v429, %v428
    %v522 = vpack.c.b16 %v431, %v430
    %v523 = vpack.c.b16 %v433, %v432
    %v524 = vpack.c.b16 %v435, %v434
    %v525 = vpack.c.b16 %v437, %v436
    %v526 = vpack.c.b16 %v439, %v438
    %v527 = vpack.c.b16 %v441, %v440
    %v528 = vpack.c.b16 %v443, %v442
    %v529 = vpack.c.b16 %v445, %v444
    %v530 = vpack.c.b16 %v447, %v446
    %v531 = vpack.c.b16 %v449, %v448
    %v532 = vpack.c.b16 %v451, %v450
    %v533 = vpack.c.b16 %v453, %v452
    %v534 = vpack.c.b16 %v455, %v454
    %v535 = vpack.c.b16 %v457, %v456
    %v536 = vpack.c.b16 %v459, %v458
    %v537 = vpack.c.b16 %v461, %v460
    %v538 = vpack.c.b16 %v463, %v462
    %v539 = vpack.c.b16 %v465, %v464
    %v540 = vpack.c.b16 %v467, %v466
    %v541 = vpack.c.b16 %v469, %v468
    %v542 = vpack.c.b16 %v471, %v470
    %v543 = vpack.c.b16 %v473, %v472
    %v544 = vpack.c.b16 %v475, %v474
    %v545 = vpack.c.b16 %v477, %v476
    %v546 = vpack.c.b16 %v479, %v478
    %v547 = vpack.c.b16 %v481, %v480
    %v548 = vpack.c.b16 %v483, %v482
    %v549 = vpack.c.b16 %v485, %v484
    %v550 = vpack.c.b16 %v487, %v486
    %v551 = vpack.c.b16 %v489, %v488
    %v552 = vpack.c.b16 %v491, %v490
    %v553 = vpack.c.b16 %v493, %v492
    %v554 = vpack.c.b16 %v495, %v494
    %v555 = vpack.c.b16 %v497, %v496
    %v556 = vpack.c.b16 %v499, %v498
    %v557 = vpack.c.b16 %v501, %v500
    %v558 = vpack.c.b16 %v503, %v502
    %v559 = vpack.c.b16 %v505, %v504
    %v560 = vpack.c.b16 %v507, %v506
    %v561 = vpack.c.b16 %v509, %v508
    %v562 = vpack.c.b16 %v511, %v510
    %v563 = vpack.c.b16 %v513, %v512
    %v564 = vpack.c.b16 %v515, %v514
    %v565 = vpack.c.b16 %v517, %v516
    %614 = vmatprep.subr.bf16.mxu0 0
    %615 = vmatpush1.bf16.msra.mxu0 %v518
    %616 = vmatprep.subr.bf16.mxu0 0
    %617 = vmatpush1.bf16.msra.mxu0 %v519
    %618 = vmatprep.subr.bf16.mxu0 0
    %619 = vmatpush1.bf16.msra.mxu0 %v520
    %620 = vmatprep.subr.bf16.mxu0 0
    %621 = vmatpush1.bf16.msra.mxu0 %v521
    %622 = vmatprep.subr.bf16.mxu0 0
    %623 = vmatpush1.bf16.msra.mxu0 %v522
    %624 = vmatprep.subr.bf16.mxu0 0
    %625 = vmatpush1.bf16.msra.mxu0 %v523
    %626 = vmatprep.subr.bf16.mxu0 0
    %627 = vmatpush1.bf16.msra.mxu0 %v524
    %628 = vmatprep.subr.bf16.mxu0 0
    %629 = vmatpush1.bf16.msra.mxu0 %v525
    %630 = vmatprep.subr.bf16.mxu0 0
    %631 = vmatpush1.bf16.msra.mxu0 %v526
    %632 = vmatprep.subr.bf16.mxu0 0
    %633 = vmatpush1.bf16.msra.mxu0 %v527
    %634 = vmatprep.subr.bf16.mxu0 0
    %635 = vmatpush1.bf16.msra.mxu0 %v528
    %636 = vmatprep.subr.bf16.mxu0 0
    %637 = vmatpush1.bf16.msra.mxu0 %v529
    %638 = vmatprep.subr.bf16.mxu0 0
    %639 = vmatpush1.bf16.msra.mxu0 %v530
    %640 = vmatprep.subr.bf16.mxu0 0
    %641 = vmatpush1.bf16.msra.mxu0 %v531
    %642 = vmatprep.subr.bf16.mxu0 0
    %643 = vmatpush1.bf16.msra.mxu0 %v532
    %644 = vmatprep.subr.bf16.mxu0 0
    %645 = vmatpush1.bf16.msra.mxu0 %v533
    %646 = vmatprep.mubr.bf16.mxu0 %v225
    %647 = vmatmul.mubr.bf16.gmra.mrb[0].mxu0 %v224
    %v648 = vpop.f32.mrb[0].mxu0
    %v649 = vadd.f32 0.0, %v648
    %v650 = vpop.f32.mrb[0].mxu0
    %v651 = vpop.f32.mrb[0].mxu0
    %v652 = vpop.f32.mrb[0].mxu0
    %653 = vdwg.mxu0
    %654 = vmatprep.subr.bf16.mxu0 0
    %655 = vmatpush1.bf16.msra.mxu0 %v534
    %656 = vmatprep.subr.bf16.mxu0 0
    %657 = vmatpush1.bf16.msra.mxu0 %v535
    %658 = vmatprep.subr.bf16.mxu0 0
    %659 = vmatpush1.bf16.msra.mxu0 %v536
    %660 = vmatprep.subr.bf16.mxu0 0
    %661 = vmatpush1.bf16.msra.mxu0 %v537
    %662 = vmatprep.subr.bf16.mxu0 0
    %663 = vmatpush1.bf16.msra.mxu0 %v538
    %664 = vmatprep.subr.bf16.mxu0 0
    %665 = vmatpush1.bf16.msra.mxu0 %v539
    %666 = vmatprep.subr.bf16.mxu0 0
    %667 = vmatpush1.bf16.msra.mxu0 %v540
    %668 = vmatprep.subr.bf16.mxu0 0
    %669 = vmatpush1.bf16.msra.mxu0 %v541
    %670 = vmatprep.subr.bf16.mxu0 0
    %671 = vmatpush1.bf16.msra.mxu0 %v542
    %672 = vmatprep.subr.bf16.mxu0 0
    %673 = vmatpush1.bf16.msra.mxu0 %v543
    %674 = vmatprep.subr.bf16.mxu0 0
    %675 = vmatpush1.bf16.msra.mxu0 %v544
    %676 = vmatprep.subr.bf16.mxu0 0
    %677 = vmatpush1.bf16.msra.mxu0 %v545
    %678 = vmatprep.subr.bf16.mxu0 0
    %679 = vmatpush1.bf16.msra.mxu0 %v546
    %680 = vmatprep.subr.bf16.mxu0 0
    %681 = vmatpush1.bf16.msra.mxu0 %v547
    %682 = vmatprep.subr.bf16.mxu0 0
    %683 = vmatpush1.bf16.msra.mxu0 %v548
    %684 = vmatprep.subr.bf16.mxu0 0
    %685 = vmatpush1.bf16.msra.mxu0 %v549
    %686 = vmatprep.mubr.bf16.mxu0 %v227
    %687 = vmatmul.mubr.bf16.gmra.mrb[0].mxu0 %v226
    %v688 = vpop.f32.mrb[0].mxu0
    %v689 = vadd.f32 %v649, %v688
    %v690 = vpop.f32.mrb[0].mxu0
    %v691 = vpop.f32.mrb[0].mxu0
    %v692 = vpop.f32.mrb[0].mxu0
    %693 = vdwg.mxu0
    %694 = vmatprep.subr.bf16.mxu0 0
    %695 = vmatpush1.bf16.msra.mxu0 %v550
    %696 = vmatprep.subr.bf16.mxu0 0
    %697 = vmatpush1.bf16.msra.mxu0 %v551
    %698 = vmatprep.subr.bf16.mxu0 0
    %699 = vmatpush1.bf16.msra.mxu0 %v552
    %700 = vmatprep.subr.bf16.mxu0 0
    %701 = vmatpush1.bf16.msra.mxu0 %v553
    %702 = vmatprep.subr.bf16.mxu0 0
    %703 = vmatpush1.bf16.msra.mxu0 %v554
    %704 = vmatprep.subr.bf16.mxu0 0
    %705 = vmatpush1.bf16.msra.mxu0 %v555
    %706 = vmatprep.subr.bf16.mxu0 0
    %707 = vmatpush1.bf16.msra.mxu0 %v556
    %708 = vmatprep.subr.bf16.mxu0 0
    %709 = vmatpush1.bf16.msra.mxu0 %v557
    %710 = vmatprep.subr.bf16.mxu0 0
    %711 = vmatpush1.bf16.msra.mxu0 %v558
    %712 = vmatprep.subr.bf16.mxu0 0
    %713 = vmatpush1.bf16.msra.mxu0 %v559
    %714 = vmatprep.subr.bf16.mxu0 0
    %715 = vmatpush1.bf16.msra.mxu0 %v560
    %716 = vmatprep.subr.bf16.mxu0 0
    %717 = vmatpush1.bf16.msra.mxu0 %v561
    %718 = vmatprep.subr.bf16.mxu0 0
    %719 = vmatpush1.bf16.msra.mxu0 %v562
    %720 = vmatprep.subr.bf16.mxu0 0
    %721 = vmatpush1.bf16.msra.mxu0 %v563
    %722 = vmatprep.subr.bf16.mxu0 0
    %723 = vmatpush1.bf16.msra.mxu0 %v564
    %724 = vmatprep.subr.bf16.mxu0 0
    %725 = vmatpush1.bf16.msra.mxu0 %v565
    %726 = vmatprep.mubr.bf16.mxu0 %v229
    %727 = vmatmul.mubr.bf16.gmra.mrb[0].mxu0 %v228
    %v728 = vpop.f32.mrb[0].mxu0
    %v729 = vadd.f32 %v689, %v728
    %v730 = vpop.f32.mrb[0].mxu0
    %v731 = vpop.f32.mrb[0].mxu0
    %v732 = vpop.f32.mrb[0].mxu0
    %733 = vdwg.mxu0
    %v734 = vmax.f32 %v729, 0.0
    %v735 = vpack.c.bf16 %v734, %v734
    %v736 = vld [vmem:[%s2] sm:$0xf]
    %v737 = vld [vmem:[%s2 + $0x4] sm:$0xf]
    %v738 = vld [vmem:[%s2 + $0x8] sm:$0xf]
    %v739 = vld [vmem:[%s2 + $0xc] sm:$0xf]
    %v740 = vld [vmem:[%s2 + $0x10] sm:$0xf]
    %v746 = vunpack.c.l.b16 %v736
    %v747 = vunpack.c.l.b16 %v737
    %v748 = vunpack.c.l.b16 %v738
    %v749 = vunpack.c.l.b16 %v739
    %v750 = vunpack.c.l.b16 %v740
    %v751 = vpack.c.b16 %v747, %v746
    %v752 = vpack.c.b16 %v749, %v748
    %v753 = vpack.c.b16 %v750, %v750
    %vm756 = vcmask 326656
    %v758 = vsel %vm756, %v735, 0
    %vm760 = vcmask 1043456
    %v762 = vsel %vm760, %v753, 0
    %764 = vmatprep.subr.bf16.mxu0 0
    %765 = vmatpush1.bf16.msra.mxu0 %v751
    %766 = vmatprep.subr.bf16.mxu0 0
    %767 = vmatpush1.bf16.msra.mxu0 %v752
    %768 = vmatprep.subr.bf16.mxu0 0
    %769 = vmatpush1.bf16.msra.mxu0 %v762
    %770 = vmatprep.subr.bf16.mxu0 0
    %771 = vmatpush1.bf16.msra.mxu0 0
    %772 = vmatprep.subr.bf16.mxu0 0
    %773 = vmatpush1.bf16.msra.mxu0 0
    %774 = vmatprep.subr.bf16.mxu0 0
    %775 = vmatpush1.bf16.msra.mxu0 0
    %776 = vmatprep.subr.bf16.mxu0 0
    %777 = vmatpush1.bf16.msra.mxu0 0
    %778 = vmatprep.subr.bf16.mxu0 0
    %779 = vmatpush1.bf16.msra.mxu0 0
    %780 = vmatprep.subr.bf16.mxu0 0
    %781 = vmatpush1.bf16.msra.mxu0 0
    %782 = vmatprep.subr.bf16.mxu0 0
    %783 = vmatpush1.bf16.msra.mxu0 0
    %784 = vmatprep.subr.bf16.mxu0 0
    %785 = vmatpush1.bf16.msra.mxu0 0
    %786 = vmatprep.subr.bf16.mxu0 0
    %787 = vmatpush1.bf16.msra.mxu0 0
    %788 = vmatprep.subr.bf16.mxu0 0
    %789 = vmatpush1.bf16.msra.mxu0 0
    %790 = vmatprep.subr.bf16.mxu0 0
    %791 = vmatpush1.bf16.msra.mxu0 0
    %792 = vmatprep.subr.bf16.mxu0 0
    %793 = vmatpush1.bf16.msra.mxu0 0
    %794 = vmatprep.subr.bf16.mxu0 0
    %795 = vmatpush1.bf16.msra.mxu0 0
    %796 = vmatprep.mubr.bf16.mxu0 0
    %797 = vmatmul.mubr.bf16.gmra.mrb[0].mxu0 %v758
    %v798 = vpop.f32.mrb[0].mxu0
    %v799 = vadd.f32 0.0, %v798
    %v800 = vpop.f32.mrb[0].mxu0
    %v801 = vpop.f32.mrb[0].mxu0
    %v802 = vpop.f32.mrb[0].mxu0
    %803 = vdwg.mxu0
    %804 = vst [vmem:[#allocation2] sm:$0xff] %v799
    // Predicated region
    $region14: #{tpu_custom_call.1} parent=1 // pred_check
      _
    $region15: #{tpu_custom_call.1} parent=1 // pred_check_branch
      %806 = sbr.rel (0) target = $region17
    $region16: #{tpu_custom_call.1} parent=1 // pred_region
      %s808 = ssub.s32 128, 128
      %809 = vsyncadd [#allocation3], %s808
      %s811 = sshll.u32 [#allocation2], 4
      %s812 = int_to_ptr.vmem [resolvable:$true] %s811
      %814 = dma.vmem_to_hbm [thread:$0]  %s812, 128, %s3, [#allocation3]
    $region17: #{tpu_custom_call.1} parent=1 // pred_fallthru
      _
    // Predicated region
    $region18: #{tpu_custom_call.1} parent=1 // pred_check
      _
    $region19: #{tpu_custom_call.1} parent=1 // pred_check_branch
      %816 = sbr.rel (0) target = $region21
    $region20: #{tpu_custom_call.1} parent=1 // pred_region
      %817 = dma.done [#allocation3], 128
    $region21: #{tpu_custom_call.1} parent=1 // pred_fallthru
      _
    %818 = vsyncpa [#allocation3], 1

</llo_original>
